<compile_context>
chip_gen: v7x
topology: tpu7x:2x2x1
jax: 0.10.0
libtpu: 0.0.40
codegen_flags: <defaults>
</compile_context>

<pallas_src>
import functools

import jax
import jax.numpy as jnp
from jax.experimental import pallas as pl
from jax.experimental.pallas import tpu as pltpu


def _round_up(a, m):
    return (a + m - 1) // m * m


def _pad_block(w2d, rows, cols, dtype):
    """Zero-pad a 2-D weight block to (rows, cols)."""
    out = jnp.zeros((rows, cols), dtype)
    return out.at[: w2d.shape[0], : w2d.shape[1]].set(w2d.astype(dtype))


def _pad_bias(b, rows):
    """Bias packed as (rows, 128) f32 (value in lane 0) so slab DMA stays dense."""
    out = jnp.zeros((rows, 128), jnp.float32)
    return out.at[: b.shape[0], 0].set(b.astype(jnp.float32))


def _tcn_fused_kernel(x_ref, w_ref, b_ref, o_ref, buf_a, buf_b, *,
                      cfgs, K, P_pad, Lp, Sseg, n_b, c0_pad):
    """Fused forward of all TemporalBlocks for n_b batch elements.

    buf_a / buf_b layout (width n_b*Sseg): per batch element a segment of
    Sseg = P_pad + Lp columns: [P_pad zero halo][Lp data].  Dots are taken over
    the whole slab (wide MXU N); only data columns are ever written/read back,
    so halo columns stay zero for every layer.
    """
    cdt = buf_a.dtype
    c_max_pad, W = buf_a.shape
    Wo = W - P_pad                       # output slab width (buffer cols [P_pad, W))

    # Zero each segment's causal halo once per grid step (all rows).
    if P_pad > 0:
        zhalo = jnp.zeros((c_max_pad, P_pad), cdt)
        for bb in range(n_b):
            buf_a[:, bb * Sseg: bb * Sseg + P_pad] = zhalo
            buf_b[:, bb * Sseg: bb * Sseg + P_pad] = zhalo

    # Stage the n_b batch elements side by side along lanes.
    for bb in range(n_b):
        col = bb * Sseg + P_pad
        buf_a[0:c0_pad, col:col + Lp] = x_ref[bb].astype(cdt)

    def causal_conv(src, c_in_p, c_out_p, tap_rows, bias_row, dil):
        # K accumulating dots (accumulation happens in the MXU result path)
        # instead of materializing a (K*C_in, W) concatenated operand.
        acc = None
        for k, roff in enumerate(tap_rows):
            shift = (K - 1 - k) * dil
            w_k = w_ref[roff:roff + c_out_p, 0:c_in_p]
            tap = src[0:c_in_p, P_pad - shift:P_pad - shift + Wo]
            part = jnp.dot(w_k, tap, preferred_element_type=jnp.float32)
            acc = part if acc is None else acc + part
        return acc + b_ref[bias_row:bias_row + c_out_p, 0:1]

    n_layers = len(cfgs)
    for li, cfg in enumerate(cfgs):
        d, c_in_p, c_out_p = cfg["d"], cfg["c_in_pad"], cfg["c_out_pad"]

        # conv1 -> chomp (implicit via halo) -> relu -> dropout (identity)
        h1 = jnp.maximum(
            causal_conv(buf_a, c_in_p, c_out_p, cfg["w1"], cfg["b1"], d), 0.0)
        # TODO(synk): for small layers on v5e, keep h1 in registers and feed conv2
        # with lane-shifted / zero-masked taps instead of this buf_b round trip.
        for bb in range(n_b):
            s = bb * Sseg
            buf_b[0:c_out_p, s + P_pad:s + P_pad + Lp] = h1[:, s:s + Lp].astype(cdt)

        # conv2 -> chomp -> relu -> dropout (identity)
        h2 = jnp.maximum(
            causal_conv(buf_b, c_out_p, c_out_p, cfg["w2"], cfg["b2"], d), 0.0)

        # residual branch (1x1 conv when channel counts differ, else identity)
        if cfg["wd"] is not None:
            wd = w_ref[cfg["wd"]:cfg["wd"] + c_out_p, 0:c_in_p]
            res = (jnp.dot(wd, buf_a[0:c_in_p, P_pad:W],
                           preferred_element_type=jnp.float32)
                   + b_ref[cfg["bd"]:cfg["bd"] + c_out_p, 0:1])
        else:
            res = buf_a[0:c_out_p, P_pad:W].astype(jnp.float32)

        y = jnp.maximum(h2 + res, 0.0)

        if li == n_layers - 1:
            for bb in range(n_b):                    # only HBM writes
                o_ref[bb] = y[:, bb * Sseg:bb * Sseg + Lp].astype(o_ref.dtype)
        else:
            for bb in range(n_b):                    # stays in VMEM
                s = bb * Sseg
                buf_a[0:c_out_p, s + P_pad:s + P_pad + Lp] = y[:, s:s + Lp].astype(cdt)


def temporal_conv_net(x, params, kernel_size, *, compute_dtype=jnp.bfloat16,
                      out_dtype=None, batch_fold=None):
    """x: (B, C_in, L) -> (B, num_channels[-1], L). Whole TCN stack in one kernel."""
    B, c0, L = x.shape
    K = int(kernel_size)
    out_dtype = x.dtype if out_dtype is None else out_dtype

    bytes_cdt = jnp.dtype(compute_dtype).itemsize
    cpad = 16 if bytes_cdt == 2 else 8            # dtype-aware sublane packing
    Lp = _round_up(L, 128)                        # lane-dense length
    c0_pad = _round_up(c0, cpad)

    # ---- pass 1: per-layer shapes / dilations ------------------------------
    dils, c_outs, c_out_pads = [], [], []
    p_max = 0
    for prm in params:
        d = int(prm["dilation"])
        c_out = prm["w1"].shape[0]
        dils.append(d)
        c_outs.append(c_out)
        c_out_pads.append(_round_up(c_out, cpad))
        p_max = max(p_max, (K - 1) * d)
    c_last, c_last_pad = c_outs[-1], c_out_pads[-1]
    c_max_pad = max([c0_pad] + c_out_pads)
    P_pad = _round_up(p_max, 128) if p_max > 0 else 0   # lane-aligned causal halo
    Sseg = P_pad + Lp                                   # per-batch-element segment

    # ---- batch folding into the matmul N dimension -------------------------
    if batch_fold is None:
        target = max(1, 512 // Lp)                       # widen N to ~>=512 lanes
        batch_fold = max(1, min(target, B // 2 if B >= 2 else 1))  # keep >=2 grid steps
    n_b = max(1, int(batch_fold))

    def _working_set(nb):                                # scratch + f32 temporaries
        w_ = nb * Sseg
        return 2 * c_max_pad * w_ * bytes_cdt + 6 * c_max_pad * (w_ - P_pad) * 4

    while n_b > 1 and _working_set(n_b) > (40 << 20):    # conservative for v7x 64 MiB
        n_b -= 1
    G = -(-B // n_b)
    Bp = G * n_b

    # ---- pass 2: pack all weights / biases into two contiguous slabs -------
    blocks, bias_blocks, cfgs = [], [], []
    row = brow = 0
    c_prev_pad = c0_pad
    for li, prm in enumerate(params):
        d, c_out, c_out_pad = dils[li], c_outs[li], c_out_pads[li]
        has_down = prm["wd"] is not None

        w1_offs = []
        for k in range(K):
            blocks.append(_pad_block(prm["w1"][:, :, k], c_out_pad, c_max_pad, compute_dtype))
            w1_offs.append(row); row += c_out_pad
        w2_offs = []
        for k in range(K):
            blocks.append(_pad_block(prm["w2"][:, :, k], c_out_pad, c_max_pad, compute_dtype))
            w2_offs.append(row); row += c_out_pad
        wd_off = None
        if has_down:
            blocks.append(_pad_block(prm["wd"], c_out_pad, c_max_pad, compute_dtype))
            wd_off = row; row += c_out_pad

        b1_off = brow; bias_blocks.append(_pad_bias(prm["b1"], c_out_pad)); brow += c_out_pad
        b2_off = brow; bias_blocks.append(_pad_bias(prm["b2"], c_out_pad)); brow += c_out_pad
        bd_off = None
        if has_down:
            bd_off = brow; bias_blocks.append(_pad_bias(prm["bd"], c_out_pad)); brow += c_out_pad

        cfgs.append(dict(d=d, c_in_pad=c_prev_pad, c_out_pad=c_out_pad,
                         w1=tuple(w1_offs), w2=tuple(w2_offs), wd=wd_off,
                         b1=b1_off, b2=b2_off, bd=bd_off))
        c_prev_pad = c_out_pad

    w_slab = jnp.concatenate(blocks, axis=0)       # (sum rows, c_max_pad), compute_dtype
    b_slab = jnp.concatenate(bias_blocks, axis=0)  # (sum rows, 128), f32

    # ---- pad input once in the wrapper (zero channels / zero right length) --
    x_p = jnp.zeros((Bp, c0_pad, Lp), compute_dtype)
    x_p = x_p.at[:B, :c0, :L].set(x.astype(compute_dtype))

    # ---- explicit VMEM budget ----------------------------------------------
    W = n_b * Sseg
    vmem_budget = (
        2 * c_max_pad * W * bytes_cdt                                   # scratch buffers
        + 2 * n_b * c0_pad * Lp * bytes_cdt                             # double-buffered x block
        + 2 * n_b * c_last_pad * Lp * jnp.dtype(out_dtype).itemsize     # double-buffered out block
        + 2 * (w_slab.size * bytes_cdt + b_slab.size * 4)               # weight/bias slabs
        + 6 * c_max_pad * (W - P_pad) * 4                               # f32 epilogue temporaries
        + (4 << 20))                                                    # headroom
    vmem_limit = int(min(max(vmem_budget, 32 << 20), 64 << 20))

    kern = functools.partial(_tcn_fused_kernel, cfgs=tuple(cfgs), K=K, P_pad=P_pad,
                             Lp=Lp, Sseg=Sseg, n_b=n_b, c0_pad=c0_pad)

    out = pl.pallas_call(
        kern,
        out_shape=jax.ShapeDtypeStruct((Bp, c_last_pad, Lp), out_dtype),
        grid=(G,),
        in_specs=[
            pl.BlockSpec((n_b, c0_pad, Lp), lambda g: (g, 0, 0)),
            pl.BlockSpec(w_slab.shape, lambda g: (0, 0)),
            pl.BlockSpec(b_slab.shape, lambda g: (0, 0)),
        ],
        out_specs=pl.BlockSpec((n_b, c_last_pad, Lp), lambda g: (g, 0, 0)),
        scratch_shapes=[pltpu.VMEM((c_max_pad, W), compute_dtype),
                        pltpu.VMEM((c_max_pad, W), compute_dtype)],
        compiler_params=pltpu.CompilerParams(
            dimension_semantics=("parallel",),
            vmem_limit_bytes=vmem_limit),
    )(x_p, w_slab, b_slab)

    return out[:B, :c_last, :L]


def init_params(key, num_inputs, num_channels, kernel_size):
    """Deterministic synthetic init mirroring the module's parameter shapes
    (PyTorch layout: conv weight (C_out, C_in, K), bias (C_out,))."""
    params = []
    in_c = num_inputs
    for i, out_c in enumerate(num_channels):
        key, k1, k2, k3, k4, k5, k6 = jax.random.split(key, 7)
        w1 = 0.01 * jax.random.normal(k1, (out_c, in_c, kernel_size), jnp.float32)
        b1 = 0.01 * jax.random.normal(k2, (out_c,), jnp.float32)
        w2 = 0.01 * jax.random.normal(k3, (out_c, out_c, kernel_size), jnp.float32)
        b2 = 0.01 * jax.random.normal(k4, (out_c,), jnp.float32)
        if in_c != out_c:
            wd = 0.01 * jax.random.normal(k5, (out_c, in_c), jnp.float32)
            bd = 0.01 * jax.random.normal(k6, (out_c,), jnp.float32)
        else:
            wd, bd = None, None
        params.append(dict(w1=w1, b1=b1, w2=w2, b2=b2, wd=wd, bd=bd,
                           dilation=2 ** i))
        in_c = out_c
    return params


# ---------- pure-JAX reference (for correctness check only) ----------
def _ref_block(x, p, kernel_size):
    d = p["dilation"]
    pad = (kernel_size - 1) * d

    def conv(inp, w, b):
        y = jax.lax.conv_general_dilated(
            inp, w, window_strides=(1,), padding=[(pad, pad)],
            rhs_dilation=(d,), dimension_numbers=("NCH", "OIH", "NCH"))
        if pad > 0:
            y = y[:, :, :y.shape[2] - pad]        # Chomp1d
        return y + b[None, :, None]

    h1 = jnp.maximum(conv(x, p["w1"], p["b1"]), 0.0)
    h2 = jnp.maximum(conv(h1, p["w2"], p["b2"]), 0.0)
    if p["wd"] is not None:
        res = jnp.einsum("oc,bcl->bol", p["wd"], x) + p["bd"][None, :, None]
    else:
        res = x
    return jnp.maximum(h2 + res, 0.0)


def _ref_tcn(x, params, kernel_size):
    y = x
    for p in params:
        y = _ref_block(y, p, kernel_size)
    return y


if __name__ == "__main__":
    key = jax.random.PRNGKey(0)

    # ------------------ test 1: small TCN, 2 blocks, K=2 --------------------
    k1, k2, k3, k4 = jax.random.split(key, 4)
    B, C_in, L = 2, 4, 16
    num_channels = [8, 8]
    kernel_size = 2

    x = jax.random.normal(k1, (B, C_in, L), jnp.float32)
    params = init_params(k2, C_in, num_channels, kernel_size)
    ref = _ref_tcn(x, params, kernel_size)

    out_f32 = jax.block_until_ready(
        temporal_conv_net(x, params, kernel_size, compute_dtype=jnp.float32))
    assert out_f32.shape == (B, num_channels[-1], L)
    assert jnp.allclose(out_f32, ref, atol=2e-3, rtol=2e-3), \
        float(jnp.max(jnp.abs(out_f32 - ref)))

    # fast path: bf16 MXU operands + bf16 output (f32 accumulation/epilogue)
    out_bf16 = jax.block_until_ready(
        temporal_conv_net(x, params, kernel_size, compute_dtype=jnp.bfloat16,
                          out_dtype=jnp.bfloat16))
    assert out_bf16.shape == (B, num_channels[-1], L)
    assert jnp.allclose(out_bf16.astype(jnp.float32), ref, atol=2e-2, rtol=2e-2), \
        float(jnp.max(jnp.abs(out_bf16.astype(jnp.float32) - ref)))

    # ------- test 2: 3 blocks, K=3, uneven channels, batch folding (n_b=2) ---
    B2, C_in2, L2 = 3, 3, 20
    num_channels2 = [6, 10, 10]
    kernel_size2 = 3

    x2 = jax.random.normal(k3, (B2, C_in2, L2), jnp.float32)
    params2 = init_params(k4, C_in2, num_channels2, kernel_size2)
    ref2 = _ref_tcn(x2, params2, kernel_size2)

    out2 = jax.block_until_ready(
        temporal_conv_net(x2, params2, kernel_size2, compute_dtype=jnp.float32,
                          batch_fold=2))
    assert out2.shape == (B2, num_channels2[-1], L2)
    assert jnp.allclose(out2, ref2, atol=2e-3, rtol=2e-3), \
        float(jnp.max(jnp.abs(out2 - ref2)))

    print("KERNEL_OK")
</pallas_src>

<mosaic_0001>
module attributes {stable_mosaic.version = 11 : i64} {
  func.func @_tcn_fused_kernel(%arg0: i32, %arg1: memref<1x8x128xf32, #tpu.memory_space<vmem>>, %arg2: memref<72x8xf32, #tpu.memory_space<vmem>>, %arg3: memref<40x128xf32, #tpu.memory_space<vmem>>, %arg4: memref<1x8x128xf32, #tpu.memory_space<vmem>>, %arg5: memref<8x256xf32, #tpu.memory_space<vmem>>, %arg6: memref<8x256xf32, #tpu.memory_space<vmem>>) attributes {dimension_semantics = [#tpu.dimension_semantics<parallel>], iteration_bounds = array<i64: 2>, scalar_prefetch = 0 : i64, scratch_operands = 2 : i64, tpu.core_type = #tpu.core_type<tc>, window_params = [{transform_indices = @transform_0, window_bounds = array<i64: 1, 8, 128>}, {pipeline_mode = #tpu.pipeline_mode<synchronous>, transform_indices = @transform_1, window_bounds = array<i64: 72, 8>}, {pipeline_mode = #tpu.pipeline_mode<synchronous>, transform_indices = @transform_2, window_bounds = array<i64: 40, 128>}, {transform_indices = @transform_3, window_bounds = array<i64: 1, 8, 128>}]} {
    %cst = arith.constant 0.000000e+00 : f32
    %0 = vector.broadcast %cst : f32 to vector<8x128xf32>
    %c0 = arith.constant 0 : index
    %c0_0 = arith.constant 0 : index
    %1 = vector.load %arg5[%c0, %c0_0] : memref<8x256xf32, #tpu.memory_space<vmem>>, vector<8x128xf32>
    tpu.vector_store %arg5[%c0, %c0_0], %0 {strides = array<i32>} : memref<8x256xf32, #tpu.memory_space<vmem>>, vector<8x128xf32>,
    %c0_1 = arith.constant 0 : index
    %c0_2 = arith.constant 0 : index
    %2 = vector.load %arg6[%c0_1, %c0_2] : memref<8x256xf32, #tpu.memory_space<vmem>>, vector<8x128xf32>
    tpu.vector_store %arg6[%c0_1, %c0_2], %0 {strides = array<i32>} : memref<8x256xf32, #tpu.memory_space<vmem>>, vector<8x128xf32>,
    %c0_3 = arith.constant 0 : index
    %c0_4 = arith.constant 0 : index
    %c0_5 = arith.constant 0 : index
    %3 = vector.load %arg1[%c0_3, %c0_4, %c0_5] : memref<1x8x128xf32, #tpu.memory_space<vmem>>, vector<1x8x128xf32>
    %4 = vector.shape_cast %3 : vector<1x8x128xf32> to vector<8x128xf32>
    %c0_6 = arith.constant 0 : index
    %c128 = arith.constant 128 : index
    %5 = vector.load %arg5[%c0_6, %c128] : memref<8x256xf32, #tpu.memory_space<vmem>>, vector<8x128xf32>
    tpu.vector_store %arg5[%c0_6, %c128], %4 {strides = array<i32>} : memref<8x256xf32, #tpu.memory_space<vmem>>, vector<8x128xf32>,
    %c0_7 = arith.constant 0 : index
    %c0_8 = arith.constant 0 : index
    %6 = vector.load %arg2[%c0_7, %c0_8] : memref<72x8xf32, #tpu.memory_space<vmem>>, vector<8x8xf32>
    %c0_9 = arith.constant 0 : index
    %c127 = arith.constant 127 : index
    %7 = vector.load %arg5[%c0_9, %c127] : memref<8x256xf32, #tpu.memory_space<vmem>>, vector<8x128xf32>
    %cst_10 = arith.constant dense<0.000000e+00> : vector<8x128xf32>
    %8 = tpu.matmul %6, %7, %cst_10 {dimension_numbers = #tpu.dot_dimension_numbers<[1], [0], [0], [1], [0, 0, 1, 1], [], []>} : vector<8x8xf32>, vector<8x128xf32>, vector<8x128xf32> -> vector<8x128xf32>
    %c8 = arith.constant 8 : index
    %c0_11 = arith.constant 0 : index
    %9 = vector.load %arg2[%c8, %c0_11] : memref<72x8xf32, #tpu.memory_space<vmem>>, vector<8x8xf32>
    %c0_12 = arith.constant 0 : index
    %c128_13 = arith.constant 128 : index
    %10 = vector.load %arg5[%c0_12, %c128_13] : memref<8x256xf32, #tpu.memory_space<vmem>>, vector<8x128xf32>
    %cst_14 = arith.constant dense<0.000000e+00> : vector<8x128xf32>
    %11 = tpu.matmul %9, %10, %cst_14 {dimension_numbers = #tpu.dot_dimension_numbers<[1], [0], [0], [1], [0, 0, 1, 1], [], []>} : vector<8x8xf32>, vector<8x128xf32>, vector<8x128xf32> -> vector<8x128xf32>
    %12 = arith.addf %8, %11 : vector<8x128xf32>
    %c0_15 = arith.constant 0 : index
    %c0_16 = arith.constant 0 : index
    %13 = vector.load %arg3[%c0_15, %c0_16] : memref<40x128xf32, #tpu.memory_space<vmem>>, vector<8x1xf32>
    %14 = vector.broadcast %13 : vector<8x1xf32> to vector<8x128xf32>
    %15 = arith.addf %12, %14 : vector<8x128xf32>
    %cst_17 = arith.constant 0.000000e+00 : f32
    %16 = vector.broadcast %cst_17 : f32 to vector<8x128xf32>
    %17 = arith.maximumf %15, %16 : vector<8x128xf32>
    %c0_18 = arith.constant 0 : index
    %c128_19 = arith.constant 128 : index
    %18 = vector.load %arg6[%c0_18, %c128_19] : memref<8x256xf32, #tpu.memory_space<vmem>>, vector<8x128xf32>
    tpu.vector_store %arg6[%c0_18, %c128_19], %17 {strides = array<i32>} : memref<8x256xf32, #tpu.memory_space<vmem>>, vector<8x128xf32>,
    %c16 = arith.constant 16 : index
    %c0_20 = arith.constant 0 : index
    %19 = vector.load %arg2[%c16, %c0_20] : memref<72x8xf32, #tpu.memory_space<vmem>>, vector<8x8xf32>
    %c0_21 = arith.constant 0 : index
    %c127_22 = arith.constant 127 : index
    %20 = vector.load %arg6[%c0_21, %c127_22] : memref<8x256xf32, #tpu.memory_space<vmem>>, vector<8x128xf32>
    %cst_23 = arith.constant dense<0.000000e+00> : vector<8x128xf32>
    %21 = tpu.matmul %19, %20, %cst_23 {dimension_numbers = #tpu.dot_dimension_numbers<[1], [0], [0], [1], [0, 0, 1, 1], [], []>} : vector<8x8xf32>, vector<8x128xf32>, vector<8x128xf32> -> vector<8x128xf32>
    %c24 = arith.constant 24 : index
    %c0_24 = arith.constant 0 : index
    %22 = vector.load %arg2[%c24, %c0_24] : memref<72x8xf32, #tpu.memory_space<vmem>>, vector<8x8xf32>
    %c0_25 = arith.constant 0 : index
    %c128_26 = arith.constant 128 : index
    %23 = vector.load %arg6[%c0_25, %c128_26] : memref<8x256xf32, #tpu.memory_space<vmem>>, vector<8x128xf32>
    %cst_27 = arith.constant dense<0.000000e+00> : vector<8x128xf32>
    %24 = tpu.matmul %22, %23, %cst_27 {dimension_numbers = #tpu.dot_dimension_numbers<[1], [0], [0], [1], [0, 0, 1, 1], [], []>} : vector<8x8xf32>, vector<8x128xf32>, vector<8x128xf32> -> vector<8x128xf32>
    %25 = arith.addf %21, %24 : vector<8x128xf32>
    %c8_28 = arith.constant 8 : index
    %c0_29 = arith.constant 0 : index
    %26 = vector.load %arg3[%c8_28, %c0_29] : memref<40x128xf32, #tpu.memory_space<vmem>>, vector<8x1xf32>
    %27 = vector.broadcast %26 : vector<8x1xf32> to vector<8x128xf32>
    %28 = arith.addf %25, %27 : vector<8x128xf32>
    %cst_30 = arith.constant 0.000000e+00 : f32
    %29 = vector.broadcast %cst_30 : f32 to vector<8x128xf32>
    %30 = arith.maximumf %28, %29 : vector<8x128xf32>
    %c32 = arith.constant 32 : index
    %c0_31 = arith.constant 0 : index
    %31 = vector.load %arg2[%c32, %c0_31] : memref<72x8xf32, #tpu.memory_space<vmem>>, vector<8x8xf32>
    %c0_32 = arith.constant 0 : index
    %c128_33 = arith.constant 128 : index
    %32 = vector.load %arg5[%c0_32, %c128_33] : memref<8x256xf32, #tpu.memory_space<vmem>>, vector<8x128xf32>
    %cst_34 = arith.constant dense<0.000000e+00> : vector<8x128xf32>
    %33 = tpu.matmul %31, %32, %cst_34 {dimension_numbers = #tpu.dot_dimension_numbers<[1], [0], [0], [1], [0, 0, 1, 1], [], []>} : vector<8x8xf32>, vector<8x128xf32>, vector<8x128xf32> -> vector<8x128xf32>
    %c16_35 = arith.constant 16 : index
    %c0_36 = arith.constant 0 : index
    %34 = vector.load %arg3[%c16_35, %c0_36] : memref<40x128xf32, #tpu.memory_space<vmem>>, vector<8x1xf32>
    %35 = vector.broadcast %34 : vector<8x1xf32> to vector<8x128xf32>
    %36 = arith.addf %33, %35 : vector<8x128xf32>
    %37 = arith.addf %30, %36 : vector<8x128xf32>
    %cst_37 = arith.constant 0.000000e+00 : f32
    %38 = vector.broadcast %cst_37 : f32 to vector<8x128xf32>
    %39 = arith.maximumf %37, %38 : vector<8x128xf32>
    %c0_38 = arith.constant 0 : index
    %c128_39 = arith.constant 128 : index
    %40 = vector.load %arg5[%c0_38, %c128_39] : memref<8x256xf32, #tpu.memory_space<vmem>>, vector<8x128xf32>
    tpu.vector_store %arg5[%c0_38, %c128_39], %39 {strides = array<i32>} : memref<8x256xf32, #tpu.memory_space<vmem>>, vector<8x128xf32>,
    %c40 = arith.constant 40 : index
    %c0_40 = arith.constant 0 : index
    %41 = vector.load %arg2[%c40, %c0_40] : memref<72x8xf32, #tpu.memory_space<vmem>>, vector<8x8xf32>
    %c0_41 = arith.constant 0 : index
    %c126 = arith.constant 126 : index
    %42 = vector.load %arg5[%c0_41, %c126] : memref<8x256xf32, #tpu.memory_space<vmem>>, vector<8x128xf32>
    %cst_42 = arith.constant dense<0.000000e+00> : vector<8x128xf32>
    %43 = tpu.matmul %41, %42, %cst_42 {dimension_numbers = #tpu.dot_dimension_numbers<[1], [0], [0], [1], [0, 0, 1, 1], [], []>} : vector<8x8xf32>, vector<8x128xf32>, vector<8x128xf32> -> vector<8x128xf32>
    %c48 = arith.constant 48 : index
    %c0_43 = arith.constant 0 : index
    %44 = vector.load %arg2[%c48, %c0_43] : memref<72x8xf32, #tpu.memory_space<vmem>>, vector<8x8xf32>
    %c0_44 = arith.constant 0 : index
    %c128_45 = arith.constant 128 : index
    %45 = vector.load %arg5[%c0_44, %c128_45] : memref<8x256xf32, #tpu.memory_space<vmem>>, vector<8x128xf32>
    %cst_46 = arith.constant dense<0.000000e+00> : vector<8x128xf32>
    %46 = tpu.matmul %44, %45, %cst_46 {dimension_numbers = #tpu.dot_dimension_numbers<[1], [0], [0], [1], [0, 0, 1, 1], [], []>} : vector<8x8xf32>, vector<8x128xf32>, vector<8x128xf32> -> vector<8x128xf32>
    %47 = arith.addf %43, %46 : vector<8x128xf32>
    %c24_47 = arith.constant 24 : index
    %c0_48 = arith.constant 0 : index
    %48 = vector.load %arg3[%c24_47, %c0_48] : memref<40x128xf32, #tpu.memory_space<vmem>>, vector<8x1xf32>
    %49 = vector.broadcast %48 : vector<8x1xf32> to vector<8x128xf32>
    %50 = arith.addf %47, %49 : vector<8x128xf32>
    %cst_49 = arith.constant 0.000000e+00 : f32
    %51 = vector.broadcast %cst_49 : f32 to vector<8x128xf32>
    %52 = arith.maximumf %50, %51 : vector<8x128xf32>
    %c0_50 = arith.constant 0 : index
    %c128_51 = arith.constant 128 : index
    %53 = vector.load %arg6[%c0_50, %c128_51] : memref<8x256xf32, #tpu.memory_space<vmem>>, vector<8x128xf32>
    tpu.vector_store %arg6[%c0_50, %c128_51], %52 {strides = array<i32>} : memref<8x256xf32, #tpu.memory_space<vmem>>, vector<8x128xf32>,
    %c56 = arith.constant 56 : index
    %c0_52 = arith.constant 0 : index
    %54 = vector.load %arg2[%c56, %c0_52] : memref<72x8xf32, #tpu.memory_space<vmem>>, vector<8x8xf32>
    %c0_53 = arith.constant 0 : index
    %c126_54 = arith.constant 126 : index
    %55 = vector.load %arg6[%c0_53, %c126_54] : memref<8x256xf32, #tpu.memory_space<vmem>>, vector<8x128xf32>
    %cst_55 = arith.constant dense<0.000000e+00> : vector<8x128xf32>
    %56 = tpu.matmul %54, %55, %cst_55 {dimension_numbers = #tpu.dot_dimension_numbers<[1], [0], [0], [1], [0, 0, 1, 1], [], []>} : vector<8x8xf32>, vector<8x128xf32>, vector<8x128xf32> -> vector<8x128xf32>
    %c64 = arith.constant 64 : index
    %c0_56 = arith.constant 0 : index
    %57 = vector.load %arg2[%c64, %c0_56] : memref<72x8xf32, #tpu.memory_space<vmem>>, vector<8x8xf32>
    %c0_57 = arith.constant 0 : index
    %c128_58 = arith.constant 128 : index
    %58 = vector.load %arg6[%c0_57, %c128_58] : memref<8x256xf32, #tpu.memory_space<vmem>>, vector<8x128xf32>
    %cst_59 = arith.constant dense<0.000000e+00> : vector<8x128xf32>
    %59 = tpu.matmul %57, %58, %cst_59 {dimension_numbers = #tpu.dot_dimension_numbers<[1], [0], [0], [1], [0, 0, 1, 1], [], []>} : vector<8x8xf32>, vector<8x128xf32>, vector<8x128xf32> -> vector<8x128xf32>
    %60 = arith.addf %56, %59 : vector<8x128xf32>
    %c32_60 = arith.constant 32 : index
    %c0_61 = arith.constant 0 : index
    %61 = vector.load %arg3[%c32_60, %c0_61] : memref<40x128xf32, #tpu.memory_space<vmem>>, vector<8x1xf32>
    %62 = vector.broadcast %61 : vector<8x1xf32> to vector<8x128xf32>
    %63 = arith.addf %60, %62 : vector<8x128xf32>
    %cst_62 = arith.constant 0.000000e+00 : f32
    %64 = vector.broadcast %cst_62 : f32 to vector<8x128xf32>
    %65 = arith.maximumf %63, %64 : vector<8x128xf32>
    %c0_63 = arith.constant 0 : index
    %c128_64 = arith.constant 128 : index
    %66 = vector.load %arg5[%c0_63, %c128_64] : memref<8x256xf32, #tpu.memory_space<vmem>>, vector<8x128xf32>
    %67 = arith.addf %65, %66 : vector<8x128xf32>
    %cst_65 = arith.constant 0.000000e+00 : f32
    %68 = vector.broadcast %cst_65 : f32 to vector<8x128xf32>
    %69 = arith.maximumf %67, %68 : vector<8x128xf32>
    %c0_66 = arith.constant 0 : index
    %c0_67 = arith.constant 0 : index
    %c0_68 = arith.constant 0 : index
    %70 = vector.load %arg4[%c0_66, %c0_67, %c0_68] : memref<1x8x128xf32, #tpu.memory_space<vmem>>, vector<1x8x128xf32>
    %71 = vector.shape_cast %70 : vector<1x8x128xf32> to vector<8x128xf32>
    %72 = vector.shape_cast %69 : vector<8x128xf32> to vector<1x8x128xf32>
    tpu.vector_store %arg4[%c0_66, %c0_67, %c0_68], %72 {strides = array<i32>} : memref<1x8x128xf32, #tpu.memory_space<vmem>>, vector<1x8x128xf32>,
    return
  }
  func.func @transform_0(%arg0: i32) -> (i32, i32, i32) {
    %c0_i32 = arith.constant 0 : i32
    %c0_i32_0 = arith.constant 0 : i32
    %c0_i32_1 = arith.constant 0 : i32
    return %arg0, %c0_i32, %c0_i32_0 : i32, i32, i32
  }
  func.func @transform_1(%arg0: i32) -> (i32, i32) {
    %c0_i32 = arith.constant 0 : i32
    %c0_i32_0 = arith.constant 0 : i32
    %c0_i32_1 = arith.constant 0 : i32
    return %c0_i32, %c0_i32_0 : i32, i32
  }
  func.func @transform_2(%arg0: i32) -> (i32, i32) {
    %c0_i32 = arith.constant 0 : i32
    %c0_i32_0 = arith.constant 0 : i32
    %c0_i32_1 = arith.constant 0 : i32
    return %c0_i32, %c0_i32_0 : i32, i32
  }
  func.func @transform_3(%arg0: i32) -> (i32, i32, i32) {
    %c0_i32 = arith.constant 0 : i32
    %c0_i32_0 = arith.constant 0 : i32
    %c0_i32_1 = arith.constant 0 : i32
    return %arg0, %c0_i32, %c0_i32_0 : i32, i32, i32
  }
}

</mosaic_0001>

<llo_original>
// kernel: tpu_custom_call.1
$region0: #{tpu_custom_call.1}
  #allocation0 [shape = 'u32[]', space=smem, size = 0x4, offset = 0x4, fixed_abs, tag = 'smem constant byte address 0x4 - core index']
  #allocation1 [shape = 'u32[144,128]{1,0:T(1,128)}', space=vmem, size = 0x12000, scoped, tag = 'internal scratch']
  #allocation2 [shape = 'f32[8,256]{1,0:T(8,128)}', space=vmem, size = 0x2000, scoped, tag = 'scratch operand']
  #allocation3 [shape = 'f32[8,256]{1,0:T(8,128)}', space=vmem, size = 0x2000, scoped, tag = 'scratch operand']
  %s0 = inlined_call_operand.vmem [shape: f32[2,8,128], index: 0, kind: input, shape index: {}]
  %s1 = inlined_call_operand.vmem [shape: f32[72,8], index: 1, kind: input, shape index: {}]
  %s2 = inlined_call_operand.vmem [shape: f32[40,128], index: 2, kind: input, shape index: {}]
  %s3 = inlined_call_operand.hbm [shape: f32[2,8,128], index: 3, kind: output, shape index: {}]
  %s4 = sld [smem:[#allocation0]]
  $region45: #{tpu_custom_call.1} parent=0
    _
  %s6 = ssub.s32 1, %s4
  %s7 = scalar_select 0, %s6, %s4
  $region1: #{tpu_custom_call.1} parent=0
    #allocation4 [shape = 'u8[8192]{0}', space=vmem, size = 0x2000, scoped, tag = 'output window, operand 0']
    #allocation5 [shape = 's32[2]{0}', space=sflag, size = 0x8, scoped, tag = 'scoped memory for tpu_custom_call.1']
    %8 = vsyncpa [#allocation5], 0
    %s9 = scalar_lea.sflag [#allocation5], 1
    %10 = vsyncpa %s9, 0
    loop: start=0, step=1, limit=4
    $region2: #{tpu_custom_call.1} parent=1 // loop_pre_header
      _
    $region3: #{tpu_custom_call.1} parent=1 // loop_header
      %s12 = sphi 0, %s16
      %p13 = scmp.ge.s32.totalorder %s12, 4
      %s22 = sphi 0, %s24
      %s25 = sphi 0, %s22
      %s26 = sphi 0, %s25
      %s42 = sphi 0, %s26
      %s46 = sphi 0, %s46
      %s48 = sphi 0, %s46
      %s49 = sphi 0, %s48
      %s63 = sphi 0, %s49
      %s67 = sphi 0, %s67
      %s69 = sphi 0, %s67
      %s70 = sphi 0, %s69
      %s84 = sphi 0, %s70
      %s90 = sphi 0, %s92
      %s93 = sphi 0, %s90
      %s94 = sphi 0, %s93
      %s110 = sphi 0, %s94
    $region4: #{tpu_custom_call.1} parent=1 // loop_header_branch
      %15 = sbr.rel (%p13) target = $region8
    $region5: #{tpu_custom_call.1} parent=1 // loop_body
      %s17 = ssub.s32 %s12, 1
      %s18 = ssub.s32 %s12, 2
      %s19 = sadd.s32 %s12, 1
      %s20 = ssub.s32 %s12, %s19
      %p21 = scmp.eq.s32.totalorder %s20, 0
      %s23 = sadd.s32 %s22, 1
      %s24 = scalar_select %p21, %s22, %s23
      %p27 = pneg %p21
      %p28 = scmp.eq.s32.totalorder %s12, 1
      %p29 = por %p27, %p28
      %p30 = scmp.ne.s32.totalorder %s22, %s25
      %p31 = scmp.eq.s32.totalorder %s12, 0
      %p32 = por %p30, %p31
      %p33 = scmp.ne.s32.totalorder %s22, %s25
      %p34 = scmp.eq.s32.totalorder %s17, 1
      %p35 = por %p33, %p34
      %p36 = scmp.ne.s32.totalorder %s25, %s26
      %p37 = scmp.eq.s32.totalorder %s17, 0
      %p38 = por %p36, %p37
      %p39 = scmp.ne.s32.totalorder %s25, %s26
      %p40 = scmp.eq.s32.totalorder %s18, 1
      %p41 = por %p39, %p40
      %p43 = scmp.ne.s32.totalorder %s26, %s42
      %p44 = scmp.eq.s32.totalorder %s18, 0
      %p45 = por %p43, %p44
      %s47 = sadd.s32 %s46, 1
      %p50 = scmp.eq.s32.totalorder %s12, 1
      %p51 = scmp.ne.s32.totalorder %s46, %s48
      %p52 = scmp.eq.s32.totalorder %s12, 0
      %p53 = por %p51, %p52
      %p54 = scmp.ne.s32.totalorder %s46, %s48
      %p55 = scmp.eq.s32.totalorder %s17, 1
      %p56 = por %p54, %p55
      %p57 = scmp.ne.s32.totalorder %s48, %s49
      %p58 = scmp.eq.s32.totalorder %s17, 0
      %p59 = por %p57, %p58
      %p60 = scmp.ne.s32.totalorder %s48, %s49
      %p61 = scmp.eq.s32.totalorder %s18, 1
      %p62 = por %p60, %p61
      %p64 = scmp.ne.s32.totalorder %s49, %s63
      %p65 = scmp.eq.s32.totalorder %s18, 0
      %p66 = por %p64, %p65
      %s68 = sadd.s32 %s67, 1
      %p71 = scmp.eq.s32.totalorder %s12, 1
      %p72 = scmp.ne.s32.totalorder %s67, %s69
      %p73 = scmp.eq.s32.totalorder %s12, 0
      %p74 = por %p72, %p73
      %p75 = scmp.ne.s32.totalorder %s67, %s69
      %p76 = scmp.eq.s32.totalorder %s17, 1
      %p77 = por %p75, %p76
      %p78 = scmp.ne.s32.totalorder %s69, %s70
      %p79 = scmp.eq.s32.totalorder %s17, 0
      %p80 = por %p78, %p79
      %p81 = scmp.ne.s32.totalorder %s69, %s70
      %p82 = scmp.eq.s32.totalorder %s18, 1
      %p83 = por %p81, %p82
      %p85 = scmp.ne.s32.totalorder %s70, %s84
      %p86 = scmp.eq.s32.totalorder %s18, 0
      %p87 = por %p85, %p86
      %s88 = ssub.s32 %s12, %s19
      %p89 = scmp.eq.s32.totalorder %s88, 0
      %s91 = sadd.s32 %s90, 1
      %s92 = scalar_select %p89, %s90, %s91
      %p95 = pneg %p89
      %p96 = scmp.eq.s32.totalorder %s12, 1
      %p97 = por %p95, %p96
      %p98 = scmp.ne.s32.totalorder %s90, %s93
      %p99 = scmp.eq.s32.totalorder %s12, 0
      %p100 = por %p98, %p99
      %p101 = scmp.ne.s32.totalorder %s90, %s93
      %p102 = scmp.eq.s32.totalorder %s17, 1
      %p103 = por %p101, %p102
      %p104 = scmp.ne.s32.totalorder %s93, %s94
      %p105 = scmp.eq.s32.totalorder %s17, 0
      %p106 = por %p104, %p105
      %p107 = scmp.ne.s32.totalorder %s93, %s94
      %p108 = scmp.eq.s32.totalorder %s18, 1
      %p109 = por %p107, %p108
      %p111 = scmp.ne.s32.totalorder %s94, %s110
      %p112 = scmp.eq.s32.totalorder %s18, 0
      %p113 = por %p111, %p112
      %p114 = scmp.le.s32.totalorder 1, %s12
      %p115 = scmp.lt.s32.totalorder %s12, 3
      %p116 = pnand %p114, %p115
      %p117 = pneg %p116
      // Predicated region
      $region9: #{tpu_custom_call.1} parent=5 // pred_check
        _
      $region10: #{tpu_custom_call.1} parent=5 // pred_check_branch
        %119 = sbr.rel (%p116) target = $region12
      $region11: #{tpu_custom_call.1} parent=5 // pred_region
        %s120 = ssub.s32 %s12, 1
        // Predicated region
        $region13: #{tpu_custom_call.1} parent=11 // pred_check
          %p121 = pneg %p59
        $region14: #{tpu_custom_call.1} parent=11 // pred_check_branch
          %123 = sbr.rel (%p121) target = $region16
        $region15: #{tpu_custom_call.1} parent=11 // pred_region
          _
        $region16: #{tpu_custom_call.1} parent=11 // pred_fallthru
          _
        // Predicated region
        $region17: #{tpu_custom_call.1} parent=11 // pred_check
          %p124 = pneg %p80
        $region18: #{tpu_custom_call.1} parent=11 // pred_check_branch
          %126 = sbr.rel (%p124) target = $region20
        $region19: #{tpu_custom_call.1} parent=11 // pred_region
          _
        $region20: #{tpu_custom_call.1} parent=11 // pred_fallthru
          _
      $region12: #{tpu_custom_call.1} parent=5 // pred_fallthru
        _
      %p127 = scmp.lt.s32.totalorder %s12, 2
      // Predicated region
      $region21: #{tpu_custom_call.1} parent=5 // pred_check
        %p128 = pneg %p127
      $region22: #{tpu_custom_call.1} parent=5 // pred_check_branch
        %130 = sbr.rel (%p128) target = $region24
      $region23: #{tpu_custom_call.1} parent=5 // pred_region
        // Predicated region
        $region25: #{tpu_custom_call.1} parent=23 // pred_check
          %p131 = pneg %p32
        $region26: #{tpu_custom_call.1} parent=23 // pred_check_branch
          %133 = sbr.rel (%p131) target = $region28
        $region27: #{tpu_custom_call.1} parent=23 // pred_region
          %p134 = scmp.lt.s32.totalorder %s12, 1
          %s135 = scalar_select %p134, %s12, 1
          %s136 = smul.addr %s135, 8
          %s137 = scalar_lea.vmem %s0, %s136
        $region28: #{tpu_custom_call.1} parent=23 // pred_fallthru
          _
      $region24: #{tpu_custom_call.1} parent=5 // pred_fallthru
        _
      %p138 = scmp.le.s32.totalorder 1, %s12
      %p139 = scmp.lt.s32.totalorder %s12, 3
      %p140 = pnand %p138, %p139
      %p141 = pneg %p140
      // Predicated region
      $region29: #{tpu_custom_call.1} parent=5 // pred_check
        _
      $region30: #{tpu_custom_call.1} parent=5 // pred_check_branch
        %143 = sbr.rel (%p140) target = $region32
      $region31: #{tpu_custom_call.1} parent=5 // pred_region
        %s144 = ssub.s32 %s12, 1
        %p145 = scmp.lt.s32.totalorder %s17, 1
        %s146 = scalar_select %p145, %s17, 1
        %s147 = smul.addr %s146, 8
        %s148 = scalar_lea.vmem %s0, %s147
        %p149 = pneg %p38
        %p150 = pneg %p35
        %p151 = pneg %p59
        %p152 = pneg %p56
        %p153 = pneg %p80
        %p154 = pneg %p77
        %p155 = pneg %p106
        %p156 = pneg %p103
        %s157 = sand.u32 %s93, 1
        %s158 = scalar_lea.sflag [#allocation5], %s157
        %s159 = sand.u32 %s93, 1
        %s160 = smul.addr %s159, 8
        %s161 = scalar_lea.vmem [#allocation4], %s160
        %p162 = scmp.lt.s32.totalorder %s17, 1
        %s163 = scalar_select %p162, %s17, 1
        %s164 = smul.addr %s163, 8
        %s165 = scalar_lea.vmem %s0, %s164
        %166 = vst [vmem:[#allocation2] sm:$0xff] 0.0
        %167 = vst [vmem:[#allocation3] sm:$0xff] 0.0
        %v168 = vld [vmem:[%s165] sm:$0xff]
        %169 = vst [vmem:[#allocation2 + $0x8] sm:$0xff] %v168
        %v170 = vld [vmem:[%s1] sm:$0xff]
        %v171 = vld [vmem:[#allocation2] sm:$0xff]
        %v172 = vld [vmem:[#allocation2 + $0x8] sm:$0xff]
        %v173 = vld [vmem:[%s1 + $0x8] sm:$0xff]
        %vm174 = vcmask 64512
        %v176 = vsel %vm174, %v173, 0
        %178 = vmatprep.subr.mxu0 0.0
        %179 = vmatpush1.msra.mxu0 %v172
        %180 = vmatprep.subr.mxu0 0.0
        %181 = vmatpush1.msra.mxu0 0.0
        %182 = vmatprep.subr.mxu0 0.0
        %183 = vmatpush1.msra.mxu0 0.0
        %184 = vmatprep.subr.mxu0 0.0
        %185 = vmatpush1.msra.mxu0 0.0
        %186 = vmatprep.subr.mxu0 0.0
        %187 = vmatpush1.msra.mxu0 0.0
        %188 = vmatprep.subr.mxu0 0.0
        %189 = vmatpush1.msra.mxu0 0.0
        %190 = vmatprep.subr.mxu0 0.0
        %191 = vmatpush1.msra.mxu0 0.0
        %192 = vmatprep.subr.mxu0 0.0
        %193 = vmatpush1.msra.mxu0 0.0
        %194 = vmatprep.subr.mxu0 0.0
        %195 = vmatpush1.msra.mxu0 0.0
        %196 = vmatprep.subr.mxu0 0.0
        %197 = vmatpush1.msra.mxu0 0.0
        %198 = vmatprep.subr.mxu0 0.0
        %199 = vmatpush1.msra.mxu0 0.0
        %200 = vmatprep.subr.mxu0 0.0
        %201 = vmatpush1.msra.mxu0 0.0
        %202 = vmatprep.subr.mxu0 0.0
        %203 = vmatpush1.msra.mxu0 0.0
        %204 = vmatprep.subr.mxu0 0.0
        %205 = vmatpush1.msra.mxu0 0.0
        %206 = vmatprep.subr.mxu0 0.0
        %207 = vmatpush1.msra.mxu0 0.0
        %208 = vmatprep.subr.mxu0 0.0
        %209 = vmatpush1.msra.mxu0 0.0
        %210 = vmatprep.subr.mxu0 0.0
        %211 = vmatpush1.msra.mxu0 0.0
        %212 = vmatprep.subr.mxu0 0.0
        %213 = vmatpush1.msra.mxu0 0.0
        %214 = vmatprep.subr.mxu0 0.0
        %215 = vmatpush1.msra.mxu0 0.0
        %216 = vmatprep.subr.mxu0 0.0
        %217 = vmatpush1.msra.mxu0 0.0
        %218 = vmatprep.subr.mxu0 0.0
        %219 = vmatpush1.msra.mxu0 0.0
        %220 = vmatprep.subr.mxu0 0.0
        %221 = vmatpush1.msra.mxu0 0.0
        %222 = vmatprep.subr.mxu0 0.0
        %223 = vmatpush1.msra.mxu0 0.0
        %224 = vmatprep.subr.mxu0 0.0
        %225 = vmatpush1.msra.mxu0 0.0
        %226 = vmatprep.subr.mxu0 0.0
        %227 = vmatpush1.msra.mxu0 0.0
        %228 = vmatprep.subr.mxu0 0.0
        %229 = vmatpush1.msra.mxu0 0.0
        %230 = vmatprep.subr.mxu0 0.0
        %231 = vmatpush1.msra.mxu0 0.0
        %232 = vmatprep.subr.mxu0 0.0
        %233 = vmatpush1.msra.mxu0 0.0
        %234 = vmatprep.subr.mxu0 0.0
        %235 = vmatpush1.msra.mxu0 0.0
        %236 = vmatprep.subr.mxu0 0.0
        %237 = vmatpush1.msra.mxu0 0.0
        %238 = vmatprep.subr.mxu0 0.0
        %239 = vmatpush1.msra.mxu0 0.0
        %240 = vmatprep.subr.mxu0 0.0
        %241 = vmatpush1.msra.mxu0 0.0
        %242 = vmatprep.mubr.f32.mxu0 0.0
        %243 = vmatmul.mubr.f32.gmra.mrb[0].mxu0 %v176
        %v244 = vpop.f32.mrb[0].mxu0
        %v245 = vadd.f32 0.0, %v244
        %v246 = vpop.f32.mrb[0].mxu0
        %247 = vdwg.mxu0
        %250 = vrot.lane.b32.xlu0 %v171, 1
        %v251 = vpop.permute.xlu0 %250
        %252 = vrot.lane.b32.xlu0 %v172, 1
        %v253 = vpop.permute.xlu0 %252
        %vm254 = vcmask 7168
        %v255 = vsel %vm254, %v251, %v253
        %v258 = vsel %vm174, %v170, 0
        %260 = vmatprep.subr.mxu0 0.0
        %261 = vmatpush1.msra.mxu0 %v255
        %262 = vmatprep.subr.mxu0 0.0
        %263 = vmatpush1.msra.mxu0 0.0
        %264 = vmatprep.subr.mxu0 0.0
        %265 = vmatpush1.msra.mxu0 0.0
        %266 = vmatprep.subr.mxu0 0.0
        %267 = vmatpush1.msra.mxu0 0.0
        %268 = vmatprep.subr.mxu0 0.0
        %269 = vmatpush1.msra.mxu0 0.0
        %270 = vmatprep.subr.mxu0 0.0
        %271 = vmatpush1.msra.mxu0 0.0
        %272 = vmatprep.subr.mxu0 0.0
        %273 = vmatpush1.msra.mxu0 0.0
        %274 = vmatprep.subr.mxu0 0.0
        %275 = vmatpush1.msra.mxu0 0.0
        %276 = vmatprep.subr.mxu0 0.0
        %277 = vmatpush1.msra.mxu0 0.0
        %278 = vmatprep.subr.mxu0 0.0
        %279 = vmatpush1.msra.mxu0 0.0
        %280 = vmatprep.subr.mxu0 0.0
        %281 = vmatpush1.msra.mxu0 0.0
        %282 = vmatprep.subr.mxu0 0.0
        %283 = vmatpush1.msra.mxu0 0.0
        %284 = vmatprep.subr.mxu0 0.0
        %285 = vmatpush1.msra.mxu0 0.0
        %286 = vmatprep.subr.mxu0 0.0
        %287 = vmatpush1.msra.mxu0 0.0
        %288 = vmatprep.subr.mxu0 0.0
        %289 = vmatpush1.msra.mxu0 0.0
        %290 = vmatprep.subr.mxu0 0.0
        %291 = vmatpush1.msra.mxu0 0.0
        %292 = vmatprep.subr.mxu0 0.0
        %293 = vmatpush1.msra.mxu0 0.0
        %294 = vmatprep.subr.mxu0 0.0
        %295 = vmatpush1.msra.mxu0 0.0
        %296 = vmatprep.subr.mxu0 0.0
        %297 = vmatpush1.msra.mxu0 0.0
        %298 = vmatprep.subr.mxu0 0.0
        %299 = vmatpush1.msra.mxu0 0.0
        %300 = vmatprep.subr.mxu0 0.0
        %301 = vmatpush1.msra.mxu0 0.0
        %302 = vmatprep.subr.mxu0 0.0
        %303 = vmatpush1.msra.mxu0 0.0
        %304 = vmatprep.subr.mxu0 0.0
        %305 = vmatpush1.msra.mxu0 0.0
        %306 = vmatprep.subr.mxu0 0.0
        %307 = vmatpush1.msra.mxu0 0.0
        %308 = vmatprep.subr.mxu0 0.0
        %309 = vmatpush1.msra.mxu0 0.0
        %310 = vmatprep.subr.mxu0 0.0
        %311 = vmatpush1.msra.mxu0 0.0
        %312 = vmatprep.subr.mxu0 0.0
        %313 = vmatpush1.msra.mxu0 0.0
        %314 = vmatprep.subr.mxu0 0.0
        %315 = vmatpush1.msra.mxu0 0.0
        %316 = vmatprep.subr.mxu0 0.0
        %317 = vmatpush1.msra.mxu0 0.0
        %318 = vmatprep.subr.mxu0 0.0
        %319 = vmatpush1.msra.mxu0 0.0
        %320 = vmatprep.subr.mxu0 0.0
        %321 = vmatpush1.msra.mxu0 0.0
        %322 = vmatprep.subr.mxu0 0.0
        %323 = vmatpush1.msra.mxu0 0.0
        %324 = vmatprep.mubr.f32.mxu0 0.0
        %325 = vmatmul.mubr.f32.gmra.mrb[0].mxu0 %v258
        %v326 = vpop.f32.mrb[0].mxu0
        %v327 = vadd.f32 %v245, %v326
        %v328 = vpop.f32.mrb[0].mxu0
        %329 = vdwg.mxu0
        %v330 = vld [vmem:[%s2] sm:$0xff]
        %332 = vset.pattern.permute.xlu0 0
        %333 = vperm.xlu0 %332, %v330
        %v334 = vpop.permute.xlu0 %333
        %v336 = vadd.f32 %v327, %v334
        %v337 = vmax.f32 %v336, 0.0
        %338 = vst [vmem:[#allocation3 + $0x8] sm:$0xff] %v337
        %v339 = vld [vmem:[%s1 + $0x10] sm:$0xff]
        %v340 = vld [vmem:[#allocation3] sm:$0xff]
        %v341 = vld [vmem:[#allocation3 + $0x8] sm:$0xff]
        %v342 = vld [vmem:[%s1 + $0x18] sm:$0xff]
        %v344 = vsel %vm174, %v342, 0
        %346 = vmatprep.subr.mxu0 0.0
        %347 = vmatpush1.msra.mxu0 %v341
        %348 = vmatprep.subr.mxu0 0.0
        %349 = vmatpush1.msra.mxu0 0.0
        %350 = vmatprep.subr.mxu0 0.0
        %351 = vmatpush1.msra.mxu0 0.0
        %352 = vmatprep.subr.mxu0 0.0
        %353 = vmatpush1.msra.mxu0 0.0
        %354 = vmatprep.subr.mxu0 0.0
        %355 = vmatpush1.msra.mxu0 0.0
        %356 = vmatprep.subr.mxu0 0.0
        %357 = vmatpush1.msra.mxu0 0.0
        %358 = vmatprep.subr.mxu0 0.0
        %359 = vmatpush1.msra.mxu0 0.0
        %360 = vmatprep.subr.mxu0 0.0
        %361 = vmatpush1.msra.mxu0 0.0
        %362 = vmatprep.subr.mxu0 0.0
        %363 = vmatpush1.msra.mxu0 0.0
        %364 = vmatprep.subr.mxu0 0.0
        %365 = vmatpush1.msra.mxu0 0.0
        %366 = vmatprep.subr.mxu0 0.0
        %367 = vmatpush1.msra.mxu0 0.0
        %368 = vmatprep.subr.mxu0 0.0
        %369 = vmatpush1.msra.mxu0 0.0
        %370 = vmatprep.subr.mxu0 0.0
        %371 = vmatpush1.msra.mxu0 0.0
        %372 = vmatprep.subr.mxu0 0.0
        %373 = vmatpush1.msra.mxu0 0.0
        %374 = vmatprep.subr.mxu0 0.0
        %375 = vmatpush1.msra.mxu0 0.0
        %376 = vmatprep.subr.mxu0 0.0
        %377 = vmatpush1.msra.mxu0 0.0
        %378 = vmatprep.subr.mxu0 0.0
        %379 = vmatpush1.msra.mxu0 0.0
        %380 = vmatprep.subr.mxu0 0.0
        %381 = vmatpush1.msra.mxu0 0.0
        %382 = vmatprep.subr.mxu0 0.0
        %383 = vmatpush1.msra.mxu0 0.0
        %384 = vmatprep.subr.mxu0 0.0
        %385 = vmatpush1.msra.mxu0 0.0
        %386 = vmatprep.subr.mxu0 0.0
        %387 = vmatpush1.msra.mxu0 0.0
        %388 = vmatprep.subr.mxu0 0.0
        %389 = vmatpush1.msra.mxu0 0.0
        %390 = vmatprep.subr.mxu0 0.0
        %391 = vmatpush1.msra.mxu0 0.0
        %392 = vmatprep.subr.mxu0 0.0
        %393 = vmatpush1.msra.mxu0 0.0
        %394 = vmatprep.subr.mxu0 0.0
        %395 = vmatpush1.msra.mxu0 0.0
        %396 = vmatprep.subr.mxu0 0.0
        %397 = vmatpush1.msra.mxu0 0.0
        %398 = vmatprep.subr.mxu0 0.0
        %399 = vmatpush1.msra.mxu0 0.0
        %400 = vmatprep.subr.mxu0 0.0
        %401 = vmatpush1.msra.mxu0 0.0
        %402 = vmatprep.subr.mxu0 0.0
        %403 = vmatpush1.msra.mxu0 0.0
        %404 = vmatprep.subr.mxu0 0.0
        %405 = vmatpush1.msra.mxu0 0.0
        %406 = vmatprep.subr.mxu0 0.0
        %407 = vmatpush1.msra.mxu0 0.0
        %408 = vmatprep.subr.mxu0 0.0
        %409 = vmatpush1.msra.mxu0 0.0
        %410 = vmatprep.mubr.f32.mxu0 0.0
        %411 = vmatmul.mubr.f32.gmra.mrb[0].mxu0 %v344
        %v412 = vpop.f32.mrb[0].mxu0
        %v413 = vadd.f32 0.0, %v412
        %v414 = vpop.f32.mrb[0].mxu0
        %415 = vdwg.mxu0
        %418 = vrot.lane.b32.xlu0 %v340, 1
        %v419 = vpop.permute.xlu0 %418
        %420 = vrot.lane.b32.xlu0 %v341, 1
        %v421 = vpop.permute.xlu0 %420
        %v422 = vsel %vm254, %v419, %v421
        %v425 = vsel %vm174, %v339, 0
        %427 = vmatprep.subr.mxu0 0.0
        %428 = vmatpush1.msra.mxu0 %v422
        %429 = vmatprep.subr.mxu0 0.0
        %430 = vmatpush1.msra.mxu0 0.0
        %431 = vmatprep.subr.mxu0 0.0
        %432 = vmatpush1.msra.mxu0 0.0
        %433 = vmatprep.subr.mxu0 0.0
        %434 = vmatpush1.msra.mxu0 0.0
        %435 = vmatprep.subr.mxu0 0.0
        %436 = vmatpush1.msra.mxu0 0.0
        %437 = vmatprep.subr.mxu0 0.0
        %438 = vmatpush1.msra.mxu0 0.0
        %439 = vmatprep.subr.mxu0 0.0
        %440 = vmatpush1.msra.mxu0 0.0
        %441 = vmatprep.subr.mxu0 0.0
        %442 = vmatpush1.msra.mxu0 0.0
        %443 = vmatprep.subr.mxu0 0.0
        %444 = vmatpush1.msra.mxu0 0.0
        %445 = vmatprep.subr.mxu0 0.0
        %446 = vmatpush1.msra.mxu0 0.0
        %447 = vmatprep.subr.mxu0 0.0
        %448 = vmatpush1.msra.mxu0 0.0
        %449 = vmatprep.subr.mxu0 0.0
        %450 = vmatpush1.msra.mxu0 0.0
        %451 = vmatprep.subr.mxu0 0.0
        %452 = vmatpush1.msra.mxu0 0.0
        %453 = vmatprep.subr.mxu0 0.0
        %454 = vmatpush1.msra.mxu0 0.0
        %455 = vmatprep.subr.mxu0 0.0
        %456 = vmatpush1.msra.mxu0 0.0
        %457 = vmatprep.subr.mxu0 0.0
        %458 = vmatpush1.msra.mxu0 0.0
        %459 = vmatprep.subr.mxu0 0.0
        %460 = vmatpush1.msra.mxu0 0.0
        %461 = vmatprep.subr.mxu0 0.0
        %462 = vmatpush1.msra.mxu0 0.0
        %463 = vmatprep.subr.mxu0 0.0
        %464 = vmatpush1.msra.mxu0 0.0
        %465 = vmatprep.subr.mxu0 0.0
        %466 = vmatpush1.msra.mxu0 0.0
        %467 = vmatprep.subr.mxu0 0.0
        %468 = vmatpush1.msra.mxu0 0.0
        %469 = vmatprep.subr.mxu0 0.0
        %470 = vmatpush1.msra.mxu0 0.0
        %471 = vmatprep.subr.mxu0 0.0
        %472 = vmatpush1.msra.mxu0 0.0
        %473 = vmatprep.subr.mxu0 0.0
        %474 = vmatpush1.msra.mxu0 0.0
        %475 = vmatprep.subr.mxu0 0.0
        %476 = vmatpush1.msra.mxu0 0.0
        %477 = vmatprep.subr.mxu0 0.0
        %478 = vmatpush1.msra.mxu0 0.0
        %479 = vmatprep.subr.mxu0 0.0
        %480 = vmatpush1.msra.mxu0 0.0
        %481 = vmatprep.subr.mxu0 0.0
        %482 = vmatpush1.msra.mxu0 0.0
        %483 = vmatprep.subr.mxu0 0.0
        %484 = vmatpush1.msra.mxu0 0.0
        %485 = vmatprep.subr.mxu0 0.0
        %486 = vmatpush1.msra.mxu0 0.0
        %487 = vmatprep.subr.mxu0 0.0
        %488 = vmatpush1.msra.mxu0 0.0
        %489 = vmatprep.subr.mxu0 0.0
        %490 = vmatpush1.msra.mxu0 0.0
        %491 = vmatprep.mubr.f32.mxu0 0.0
        %492 = vmatmul.mubr.f32.gmra.mrb[0].mxu0 %v425
        %v493 = vpop.f32.mrb[0].mxu0
        %v494 = vadd.f32 %v413, %v493
        %v495 = vpop.f32.mrb[0].mxu0
        %496 = vdwg.mxu0
        %v497 = vld [vmem:[%s2 + $0x8] sm:$0xff]
        %499 = vset.pattern.permute.xlu0 0
        %500 = vperm.xlu0 %499, %v497
        %v501 = vpop.permute.xlu0 %500
        %v503 = vadd.f32 %v494, %v501
        %v504 = vmax.f32 %v503, 0.0
        %v505 = vld [vmem:[%s1 + $0x20] sm:$0xff]
        %v506 = vld [vmem:[#allocation2 + $0x8] sm:$0xff]
        %v507 = vld [vmem:[%s2 + $0x10] sm:$0xff]
        %509 = vset.pattern.permute.xlu0 0
        %510 = vperm.xlu0 %509, %v507
        %v511 = vpop.permute.xlu0 %510
        %v514 = vsel %vm174, %v505, 0
        %516 = vmatprep.subr.mxu0 0.0
        %517 = vmatpush1.msra.mxu0 %v506
        %518 = vmatprep.subr.mxu0 0.0
        %519 = vmatpush1.msra.mxu0 0.0
        %520 = vmatprep.subr.mxu0 0.0
        %521 = vmatpush1.msra.mxu0 0.0
        %522 = vmatprep.subr.mxu0 0.0
        %523 = vmatpush1.msra.mxu0 0.0
        %524 = vmatprep.subr.mxu0 0.0
        %525 = vmatpush1.msra.mxu0 0.0
        %526 = vmatprep.subr.mxu0 0.0
        %527 = vmatpush1.msra.mxu0 0.0
        %528 = vmatprep.subr.mxu0 0.0
        %529 = vmatpush1.msra.mxu0 0.0
        %530 = vmatprep.subr.mxu0 0.0
        %531 = vmatpush1.msra.mxu0 0.0
        %532 = vmatprep.subr.mxu0 0.0
        %533 = vmatpush1.msra.mxu0 0.0
        %534 = vmatprep.subr.mxu0 0.0
        %535 = vmatpush1.msra.mxu0 0.0
        %536 = vmatprep.subr.mxu0 0.0
        %537 = vmatpush1.msra.mxu0 0.0
        %538 = vmatprep.subr.mxu0 0.0
        %539 = vmatpush1.msra.mxu0 0.0
        %540 = vmatprep.subr.mxu0 0.0
        %541 = vmatpush1.msra.mxu0 0.0
        %542 = vmatprep.subr.mxu0 0.0
        %543 = vmatpush1.msra.mxu0 0.0
        %544 = vmatprep.subr.mxu0 0.0
        %545 = vmatpush1.msra.mxu0 0.0
        %546 = vmatprep.subr.mxu0 0.0
        %547 = vmatpush1.msra.mxu0 0.0
        %548 = vmatprep.subr.mxu0 0.0
        %549 = vmatpush1.msra.mxu0 0.0
        %550 = vmatprep.subr.mxu0 0.0
        %551 = vmatpush1.msra.mxu0 0.0
        %552 = vmatprep.subr.mxu0 0.0
        %553 = vmatpush1.msra.mxu0 0.0
        %554 = vmatprep.subr.mxu0 0.0
        %555 = vmatpush1.msra.mxu0 0.0
        %556 = vmatprep.subr.mxu0 0.0
        %557 = vmatpush1.msra.mxu0 0.0
        %558 = vmatprep.subr.mxu0 0.0
        %559 = vmatpush1.msra.mxu0 0.0
        %560 = vmatprep.subr.mxu0 0.0
        %561 = vmatpush1.msra.mxu0 0.0
        %562 = vmatprep.subr.mxu0 0.0
        %563 = vmatpush1.msra.mxu0 0.0
        %564 = vmatprep.subr.mxu0 0.0
        %565 = vmatpush1.msra.mxu0 0.0
        %566 = vmatprep.subr.mxu0 0.0
        %567 = vmatpush1.msra.mxu0 0.0
        %568 = vmatprep.subr.mxu0 0.0
        %569 = vmatpush1.msra.mxu0 0.0
        %570 = vmatprep.subr.mxu0 0.0
        %571 = vmatpush1.msra.mxu0 0.0
        %572 = vmatprep.subr.mxu0 0.0
        %573 = vmatpush1.msra.mxu0 0.0
        %574 = vmatprep.subr.mxu0 0.0
        %575 = vmatpush1.msra.mxu0 0.0
        %576 = vmatprep.subr.mxu0 0.0
        %577 = vmatpush1.msra.mxu0 0.0
        %578 = vmatprep.subr.mxu0 0.0
        %579 = vmatpush1.msra.mxu0 0.0
        %580 = vmatprep.mubr.f32.mxu0 0.0
        %581 = vmatmul.mubr.f32.gmra.mrb[0].mxu0 %v514
        %v582 = vpop.f32.mrb[0].mxu0
        %v583 = vadd.f32 %v511, %v582
        %v584 = vpop.f32.mrb[0].mxu0
        %585 = vdwg.mxu0
        %v586 = vadd.f32 %v504, %v583
        %v587 = vmax.f32 %v586, 0.0
        %588 = vst [vmem:[#allocation2 + $0x8] sm:$0xff] %v587
        %v589 = vld [vmem:[%s1 + $0x28] sm:$0xff]
        %v590 = vld [vmem:[#allocation2] sm:$0xff]
        %v591 = vld [vmem:[#allocation2 + $0x8] sm:$0xff]
        %v592 = vld [vmem:[%s1 + $0x30] sm:$0xff]
        %v594 = vsel %vm174, %v592, 0
        %596 = vmatprep.subr.mxu0 0.0
        %597 = vmatpush1.msra.mxu0 %v591
        %598 = vmatprep.subr.mxu0 0.0
        %599 = vmatpush1.msra.mxu0 0.0
        %600 = vmatprep.subr.mxu0 0.0
        %601 = vmatpush1.msra.mxu0 0.0
        %602 = vmatprep.subr.mxu0 0.0
        %603 = vmatpush1.msra.mxu0 0.0
        %604 = vmatprep.subr.mxu0 0.0
        %605 = vmatpush1.msra.mxu0 0.0
        %606 = vmatprep.subr.mxu0 0.0
        %607 = vmatpush1.msra.mxu0 0.0
        %608 = vmatprep.subr.mxu0 0.0
        %609 = vmatpush1.msra.mxu0 0.0
        %610 = vmatprep.subr.mxu0 0.0
        %611 = vmatpush1.msra.mxu0 0.0
        %612 = vmatprep.subr.mxu0 0.0
        %613 = vmatpush1.msra.mxu0 0.0
        %614 = vmatprep.subr.mxu0 0.0
        %615 = vmatpush1.msra.mxu0 0.0
        %616 = vmatprep.subr.mxu0 0.0
        %617 = vmatpush1.msra.mxu0 0.0
        %618 = vmatprep.subr.mxu0 0.0
        %619 = vmatpush1.msra.mxu0 0.0
        %620 = vmatprep.subr.mxu0 0.0
        %621 = vmatpush1.msra.mxu0 0.0
        %622 = vmatprep.subr.mxu0 0.0
        %623 = vmatpush1.msra.mxu0 0.0
        %624 = vmatprep.subr.mxu0 0.0
        %625 = vmatpush1.msra.mxu0 0.0
        %626 = vmatprep.subr.mxu0 0.0
        %627 = vmatpush1.msra.mxu0 0.0
        %628 = vmatprep.subr.mxu0 0.0
        %629 = vmatpush1.msra.mxu0 0.0
        %630 = vmatprep.subr.mxu0 0.0
        %631 = vmatpush1.msra.mxu0 0.0
        %632 = vmatprep.subr.mxu0 0.0
        %633 = vmatpush1.msra.mxu0 0.0
        %634 = vmatprep.subr.mxu0 0.0
        %635 = vmatpush1.msra.mxu0 0.0
        %636 = vmatprep.subr.mxu0 0.0
        %637 = vmatpush1.msra.mxu0 0.0
        %638 = vmatprep.subr.mxu0 0.0
        %639 = vmatpush1.msra.mxu0 0.0
        %640 = vmatprep.subr.mxu0 0.0
        %641 = vmatpush1.msra.mxu0 0.0
        %642 = vmatprep.subr.mxu0 0.0
        %643 = vmatpush1.msra.mxu0 0.0
        %644 = vmatprep.subr.mxu0 0.0
        %645 = vmatpush1.msra.mxu0 0.0
        %646 = vmatprep.subr.mxu0 0.0
        %647 = vmatpush1.msra.mxu0 0.0
        %648 = vmatprep.subr.mxu0 0.0
        %649 = vmatpush1.msra.mxu0 0.0
        %650 = vmatprep.subr.mxu0 0.0
        %651 = vmatpush1.msra.mxu0 0.0
        %652 = vmatprep.subr.mxu0 0.0
        %653 = vmatpush1.msra.mxu0 0.0
        %654 = vmatprep.subr.mxu0 0.0
        %655 = vmatpush1.msra.mxu0 0.0
        %656 = vmatprep.subr.mxu0 0.0
        %657 = vmatpush1.msra.mxu0 0.0
        %658 = vmatprep.subr.mxu0 0.0
        %659 = vmatpush1.msra.mxu0 0.0
        %660 = vmatprep.mubr.f32.mxu0 0.0
        %661 = vmatmul.mubr.f32.gmra.mrb[0].mxu0 %v594
        %v662 = vpop.f32.mrb[0].mxu0
        %v663 = vadd.f32 0.0, %v662
        %v664 = vpop.f32.mrb[0].mxu0
        %665 = vdwg.mxu0
        %668 = vrot.lane.b32.xlu0 %v590, 2
        %v669 = vpop.permute.xlu0 %668
        %670 = vrot.lane.b32.xlu0 %v591, 2
        %v671 = vpop.permute.xlu0 %670
        %vm672 = vcmask 15360
        %v673 = vsel %vm672, %v669, %v671
        %v676 = vsel %vm174, %v589, 0
        %678 = vmatprep.subr.mxu0 0.0
        %679 = vmatpush1.msra.mxu0 %v673
        %680 = vmatprep.subr.mxu0 0.0
        %681 = vmatpush1.msra.mxu0 0.0
        %682 = vmatprep.subr.mxu0 0.0
        %683 = vmatpush1.msra.mxu0 0.0
        %684 = vmatprep.subr.mxu0 0.0
        %685 = vmatpush1.msra.mxu0 0.0
        %686 = vmatprep.subr.mxu0 0.0
        %687 = vmatpush1.msra.mxu0 0.0
        %688 = vmatprep.subr.mxu0 0.0
        %689 = vmatpush1.msra.mxu0 0.0
        %690 = vmatprep.subr.mxu0 0.0
        %691 = vmatpush1.msra.mxu0 0.0
        %692 = vmatprep.subr.mxu0 0.0
        %693 = vmatpush1.msra.mxu0 0.0
        %694 = vmatprep.subr.mxu0 0.0
        %695 = vmatpush1.msra.mxu0 0.0
        %696 = vmatprep.subr.mxu0 0.0
        %697 = vmatpush1.msra.mxu0 0.0
        %698 = vmatprep.subr.mxu0 0.0
        %699 = vmatpush1.msra.mxu0 0.0
        %700 = vmatprep.subr.mxu0 0.0
        %701 = vmatpush1.msra.mxu0 0.0
        %702 = vmatprep.subr.mxu0 0.0
        %703 = vmatpush1.msra.mxu0 0.0
        %704 = vmatprep.subr.mxu0 0.0
        %705 = vmatpush1.msra.mxu0 0.0
        %706 = vmatprep.subr.mxu0 0.0
        %707 = vmatpush1.msra.mxu0 0.0
        %708 = vmatprep.subr.mxu0 0.0
        %709 = vmatpush1.msra.mxu0 0.0
        %710 = vmatprep.subr.mxu0 0.0
        %711 = vmatpush1.msra.mxu0 0.0
        %712 = vmatprep.subr.mxu0 0.0
        %713 = vmatpush1.msra.mxu0 0.0
        %714 = vmatprep.subr.mxu0 0.0
        %715 = vmatpush1.msra.mxu0 0.0
        %716 = vmatprep.subr.mxu0 0.0
        %717 = vmatpush1.msra.mxu0 0.0
        %718 = vmatprep.subr.mxu0 0.0
        %719 = vmatpush1.msra.mxu0 0.0
        %720 = vmatprep.subr.mxu0 0.0
        %721 = vmatpush1.msra.mxu0 0.0
        %722 = vmatprep.subr.mxu0 0.0
        %723 = vmatpush1.msra.mxu0 0.0
        %724 = vmatprep.subr.mxu0 0.0
        %725 = vmatpush1.msra.mxu0 0.0
        %726 = vmatprep.subr.mxu0 0.0
        %727 = vmatpush1.msra.mxu0 0.0
        %728 = vmatprep.subr.mxu0 0.0
        %729 = vmatpush1.msra.mxu0 0.0
        %730 = vmatprep.subr.mxu0 0.0
        %731 = vmatpush1.msra.mxu0 0.0
        %732 = vmatprep.subr.mxu0 0.0
        %733 = vmatpush1.msra.mxu0 0.0
        %734 = vmatprep.subr.mxu0 0.0
        %735 = vmatpush1.msra.mxu0 0.0
        %736 = vmatprep.subr.mxu0 0.0
        %737 = vmatpush1.msra.mxu0 0.0
        %738 = vmatprep.subr.mxu0 0.0
        %739 = vmatpush1.msra.mxu0 0.0
        %740 = vmatprep.subr.mxu0 0.0
        %741 = vmatpush1.msra.mxu0 0.0
        %742 = vmatprep.mubr.f32.mxu0 0.0
        %743 = vmatmul.mubr.f32.gmra.mrb[0].mxu0 %v676
        %v744 = vpop.f32.mrb[0].mxu0
        %v745 = vadd.f32 %v663, %v744
        %v746 = vpop.f32.mrb[0].mxu0
        %747 = vdwg.mxu0
        %v748 = vld [vmem:[%s2 + $0x18] sm:$0xff]
        %750 = vset.pattern.permute.xlu0 0
        %751 = vperm.xlu0 %750, %v748
        %v752 = vpop.permute.xlu0 %751
        %v754 = vadd.f32 %v745, %v752
        %v755 = vmax.f32 %v754, 0.0
        %756 = vst [vmem:[#allocation3 + $0x8] sm:$0xff] %v755
        %v757 = vld [vmem:[%s1 + $0x38] sm:$0xff]
        %v758 = vld [vmem:[#allocation3] sm:$0xff]
        %v759 = vld [vmem:[#allocation3 + $0x8] sm:$0xff]
        %v760 = vld [vmem:[%s1 + $0x40] sm:$0xff]
        %v762 = vsel %vm174, %v760, 0
        %764 = vmatprep.subr.mxu0 0.0
        %765 = vmatpush1.msra.mxu0 %v759
        %766 = vmatprep.subr.mxu0 0.0
        %767 = vmatpush1.msra.mxu0 0.0
        %768 = vmatprep.subr.mxu0 0.0
        %769 = vmatpush1.msra.mxu0 0.0
        %770 = vmatprep.subr.mxu0 0.0
        %771 = vmatpush1.msra.mxu0 0.0
        %772 = vmatprep.subr.mxu0 0.0
        %773 = vmatpush1.msra.mxu0 0.0
        %774 = vmatprep.subr.mxu0 0.0
        %775 = vmatpush1.msra.mxu0 0.0
        %776 = vmatprep.subr.mxu0 0.0
        %777 = vmatpush1.msra.mxu0 0.0
        %778 = vmatprep.subr.mxu0 0.0
        %779 = vmatpush1.msra.mxu0 0.0
        %780 = vmatprep.subr.mxu0 0.0
        %781 = vmatpush1.msra.mxu0 0.0
        %782 = vmatprep.subr.mxu0 0.0
        %783 = vmatpush1.msra.mxu0 0.0
        %784 = vmatprep.subr.mxu0 0.0
        %785 = vmatpush1.msra.mxu0 0.0
        %786 = vmatprep.subr.mxu0 0.0
        %787 = vmatpush1.msra.mxu0 0.0
        %788 = vmatprep.subr.mxu0 0.0
        %789 = vmatpush1.msra.mxu0 0.0
        %790 = vmatprep.subr.mxu0 0.0
        %791 = vmatpush1.msra.mxu0 0.0
        %792 = vmatprep.subr.mxu0 0.0
        %793 = vmatpush1.msra.mxu0 0.0
        %794 = vmatprep.subr.mxu0 0.0
        %795 = vmatpush1.msra.mxu0 0.0
        %796 = vmatprep.subr.mxu0 0.0
        %797 = vmatpush1.msra.mxu0 0.0
        %798 = vmatprep.subr.mxu0 0.0
        %799 = vmatpush1.msra.mxu0 0.0
        %800 = vmatprep.subr.mxu0 0.0
        %801 = vmatpush1.msra.mxu0 0.0
        %802 = vmatprep.subr.mxu0 0.0
        %803 = vmatpush1.msra.mxu0 0.0
        %804 = vmatprep.subr.mxu0 0.0
        %805 = vmatpush1.msra.mxu0 0.0
        %806 = vmatprep.subr.mxu0 0.0
        %807 = vmatpush1.msra.mxu0 0.0
        %808 = vmatprep.subr.mxu0 0.0
        %809 = vmatpush1.msra.mxu0 0.0
        %810 = vmatprep.subr.mxu0 0.0
        %811 = vmatpush1.msra.mxu0 0.0
        %812 = vmatprep.subr.mxu0 0.0
        %813 = vmatpush1.msra.mxu0 0.0
        %814 = vmatprep.subr.mxu0 0.0
        %815 = vmatpush1.msra.mxu0 0.0
        %816 = vmatprep.subr.mxu0 0.0
        %817 = vmatpush1.msra.mxu0 0.0
        %818 = vmatprep.subr.mxu0 0.0
        %819 = vmatpush1.msra.mxu0 0.0
        %820 = vmatprep.subr.mxu0 0.0
        %821 = vmatpush1.msra.mxu0 0.0
        %822 = vmatprep.subr.mxu0 0.0
        %823 = vmatpush1.msra.mxu0 0.0
        %824 = vmatprep.subr.mxu0 0.0
        %825 = vmatpush1.msra.mxu0 0.0
        %826 = vmatprep.subr.mxu0 0.0
        %827 = vmatpush1.msra.mxu0 0.0
        %828 = vmatprep.mubr.f32.mxu0 0.0
        %829 = vmatmul.mubr.f32.gmra.mrb[0].mxu0 %v762
        %v830 = vpop.f32.mrb[0].mxu0
        %v831 = vadd.f32 0.0, %v830
        %v832 = vpop.f32.mrb[0].mxu0
        %833 = vdwg.mxu0
        %836 = vrot.lane.b32.xlu0 %v758, 2
        %v837 = vpop.permute.xlu0 %836
        %838 = vrot.lane.b32.xlu0 %v759, 2
        %v839 = vpop.permute.xlu0 %838
        %v840 = vsel %vm672, %v837, %v839
        %v843 = vsel %vm174, %v757, 0
        %845 = vmatprep.subr.mxu0 0.0
        %846 = vmatpush1.msra.mxu0 %v840
        %847 = vmatprep.subr.mxu0 0.0
        %848 = vmatpush1.msra.mxu0 0.0
        %849 = vmatprep.subr.mxu0 0.0
        %850 = vmatpush1.msra.mxu0 0.0
        %851 = vmatprep.subr.mxu0 0.0
        %852 = vmatpush1.msra.mxu0 0.0
        %853 = vmatprep.subr.mxu0 0.0
        %854 = vmatpush1.msra.mxu0 0.0
        %855 = vmatprep.subr.mxu0 0.0
        %856 = vmatpush1.msra.mxu0 0.0
        %857 = vmatprep.subr.mxu0 0.0
        %858 = vmatpush1.msra.mxu0 0.0
        %859 = vmatprep.subr.mxu0 0.0
        %860 = vmatpush1.msra.mxu0 0.0
        %861 = vmatprep.subr.mxu0 0.0
        %862 = vmatpush1.msra.mxu0 0.0
        %863 = vmatprep.subr.mxu0 0.0
        %864 = vmatpush1.msra.mxu0 0.0
        %865 = vmatprep.subr.mxu0 0.0
        %866 = vmatpush1.msra.mxu0 0.0
        %867 = vmatprep.subr.mxu0 0.0
        %868 = vmatpush1.msra.mxu0 0.0
        %869 = vmatprep.subr.mxu0 0.0
        %870 = vmatpush1.msra.mxu0 0.0
        %871 = vmatprep.subr.mxu0 0.0
        %872 = vmatpush1.msra.mxu0 0.0
        %873 = vmatprep.subr.mxu0 0.0
        %874 = vmatpush1.msra.mxu0 0.0
        %875 = vmatprep.subr.mxu0 0.0
        %876 = vmatpush1.msra.mxu0 0.0
        %877 = vmatprep.subr.mxu0 0.0
        %878 = vmatpush1.msra.mxu0 0.0
        %879 = vmatprep.subr.mxu0 0.0
        %880 = vmatpush1.msra.mxu0 0.0
        %881 = vmatprep.subr.mxu0 0.0
        %882 = vmatpush1.msra.mxu0 0.0
        %883 = vmatprep.subr.mxu0 0.0
        %884 = vmatpush1.msra.mxu0 0.0
        %885 = vmatprep.subr.mxu0 0.0
        %886 = vmatpush1.msra.mxu0 0.0
        %887 = vmatprep.subr.mxu0 0.0
        %888 = vmatpush1.msra.mxu0 0.0
        %889 = vmatprep.subr.mxu0 0.0
        %890 = vmatpush1.msra.mxu0 0.0
        %891 = vmatprep.subr.mxu0 0.0
        %892 = vmatpush1.msra.mxu0 0.0
        %893 = vmatprep.subr.mxu0 0.0
        %894 = vmatpush1.msra.mxu0 0.0
        %895 = vmatprep.subr.mxu0 0.0
        %896 = vmatpush1.msra.mxu0 0.0
        %897 = vmatprep.subr.mxu0 0.0
        %898 = vmatpush1.msra.mxu0 0.0
        %899 = vmatprep.subr.mxu0 0.0
        %900 = vmatpush1.msra.mxu0 0.0
        %901 = vmatprep.subr.mxu0 0.0
        %902 = vmatpush1.msra.mxu0 0.0
        %903 = vmatprep.subr.mxu0 0.0
        %904 = vmatpush1.msra.mxu0 0.0
        %905 = vmatprep.subr.mxu0 0.0
        %906 = vmatpush1.msra.mxu0 0.0
        %907 = vmatprep.subr.mxu0 0.0
        %908 = vmatpush1.msra.mxu0 0.0
        %909 = vmatprep.mubr.f32.mxu0 0.0
        %910 = vmatmul.mubr.f32.gmra.mrb[0].mxu0 %v843
        %v911 = vpop.f32.mrb[0].mxu0
        %v912 = vadd.f32 %v831, %v911
        %v913 = vpop.f32.mrb[0].mxu0
        %914 = vdwg.mxu0
        %v915 = vld [vmem:[%s2 + $0x20] sm:$0xff]
        %917 = vset.pattern.permute.xlu0 0
        %918 = vperm.xlu0 %917, %v915
        %v919 = vpop.permute.xlu0 %918
        %v921 = vadd.f32 %v912, %v919
        %v922 = vmax.f32 %v921, 0.0
        %v923 = vld [vmem:[#allocation2 + $0x8] sm:$0xff]
        %v924 = vadd.f32 %v922, %v923
        %v925 = vmax.f32 %v924, 0.0
        %926 = vst [vmem:[%s161] sm:$0xff] %v925
        %s927 = sand.u32 %s93, 1
        %s928 = scalar_lea.sflag [#allocation5], %s927
        %s929 = sand.u32 %s93, 1
        %s930 = smul.addr %s929, 8
        %s931 = scalar_lea.vmem [#allocation4], %s930
        // Predicated region
        $region33: #{tpu_custom_call.1} parent=31 // pred_check
          %p932 = pneg %p103
        $region34: #{tpu_custom_call.1} parent=31 // pred_check_branch
          %934 = sbr.rel (%p932) target = $region36
        $region35: #{tpu_custom_call.1} parent=31 // pred_region
          %s936 = ssub.s32 128, 128
          %937 = vsyncadd %s928, %s936
          %s938 = smul.addr %s17, 128
          %s939 = scalar_lea.hbm %s3, %s938
          %s941 = sshll.u32 %s931, 4
          %s942 = int_to_ptr.vmem [resolvable:$true] %s941
          %944 = dma.vmem_to_hbm [thread:$0]  %s942, 128, %s939, %s928
        $region36: #{tpu_custom_call.1} parent=31 // pred_fallthru
          _
      $region32: #{tpu_custom_call.1} parent=5 // pred_fallthru
        _
      %p945 = scmp.le.s32.totalorder 2, %s12
      // Predicated region
      $region37: #{tpu_custom_call.1} parent=5 // pred_check
        %p946 = pneg %p945
      $region38: #{tpu_custom_call.1} parent=5 // pred_check_branch
        %948 = sbr.rel (%p946) target = $region40
      $region39: #{tpu_custom_call.1} parent=5 // pred_region
        %s949 = ssub.s32 %s12, 2
        // Predicated region
        $region41: #{tpu_custom_call.1} parent=39 // pred_check
          %p950 = pneg %p109
        $region42: #{tpu_custom_call.1} parent=39 // pred_check_branch
          %952 = sbr.rel (%p950) target = $region44
        $region43: #{tpu_custom_call.1} parent=39 // pred_region
          %s953 = sand.u32 %s94, 1
          %s954 = scalar_lea.sflag [#allocation5], %s953
          %s955 = sand.u32 %s94, 1
          %s956 = smul.addr %s955, 8
          %s957 = scalar_lea.vmem [#allocation4], %s956
          %958 = dma.done %s954, 128
        $region44: #{tpu_custom_call.1} parent=39 // pred_fallthru
          _
      $region40: #{tpu_custom_call.1} parent=5 // pred_fallthru
        _
    $region6: #{tpu_custom_call.1} parent=1 // loop_footer
      %s16 = sadd.s32 1, %s12
    $region7: #{tpu_custom_call.1} parent=1 // loop_footer_branch
      %11 = sbr.rel target = $region3
    $region8: #{tpu_custom_call.1} parent=1 // loop_exit
      _
    %959 = vsyncpa [#allocation5], 1
    %s960 = scalar_lea.sflag [#allocation5], 1
    %961 = vsyncpa %s960, 1

</llo_original>
